<compile_context>
chip_gen: v7x
topology: tpu7x:2x2x1
jax: 0.10.0
libtpu: 0.0.40
codegen_flags: <defaults>
</compile_context>

<pallas_src>
import jax
import jax.numpy as jnp
from jax.experimental import pallas as pl
from jax.experimental.pallas import tpu as pltpu


def _grouped_head_kernel(block_group_ref, x_ref, w_ref, b_ref, o_ref):
    # block_group_ref : SMEM scalar-prefetch ref (used only in index_maps)
    # x_ref : (TM, TK)    bf16 row block (all rows share one head)
    # w_ref : (1, TK, TN) bf16 weight tile of the selected head
    # b_ref : (1, 1, TN)  f32 bias tile of the selected head
    # o_ref : (TM, TN)    f32 output block; K-invariant, doubles as accumulator
    del block_group_ref
    k = pl.program_id(2)
    kt = pl.num_programs(2)

    partial = jnp.dot(x_ref[...], w_ref[0],
                      preferred_element_type=jnp.float32)

    @pl.when(k == 0)
    def _():
        o_ref[...] = partial

    @pl.when(k > 0)
    def _():
        o_ref[...] += partial

    @pl.when(k == kt - 1)
    def _():
        z = o_ref[...] + b_ref[0]
        # exp -> EUP; approx reciprocal also lowers to the otherwise-idle EUP.
        o_ref[...] = pl.reciprocal(1.0 + jnp.exp(-z), approx=True)


def _vmem_limit_bytes():
    # Generation-aware limit: ~78% of physical VMEM (~50 MiB on v7x's 64 MiB,
    # ~100 MiB on v5e/v6e's 128 MiB), leaving compiler scratch headroom.
    cap = 64 * 1024 * 1024
    try:
        cap = int(pltpu.get_tpu_info().vmem_capacity_bytes)
    except Exception:
        pass
    return int(cap * 0.78)


def _pick_tiles(B, H, Op, vmem_limit):
    """Choose (tm, tk, tn).  Prefer kt == 1 (tk == H) so the consecutive
    identical-block-index weight-DMA skip fires; N-tile before K-tiling."""
    tm = 256 if B >= 2048 else (128 if B >= 128 else 8)
    budget = vmem_limit // 2   # headroom for internal scratch / SMEM table

    def fits(tk, tn):
        # double-buffered bf16 x/w tiles + f32 bias + resident f32 out block
        per_step = 2 * (tm * tk * 2 + tk * tn * 2 + tn * 4) + 2 * (tm * tn * 4)
        return per_step <= budget

    tk_cands = [H] + [d for d in (2048, 1024, 512, 256, 128)
                      if d < H and H % d == 0]
    tn_cands = [Op] + [d for d in (4096, 2048, 1024, 512, 256, 128)
                       if d < Op and Op % d == 0]
    for tk in tk_cands:
        for tn in tn_cands:
            if fits(tk, tn):
                return tm, tk, tn
    return tm, tk_cands[-1], tn_cands[-1]


def task_forward(x, w_stack, b_stack, num, c):
    """x: [B, H] f32, w_stack: [C, H, O] (pre-transposed for x @ W),
    b_stack: [C, 1, O], num: [B] int, c: [Lc] int.  Returns [B, O] f32."""
    B, H = x.shape
    C, _, O = w_stack.shape

    # --- lane-dense output: pad O up to a multiple of 128 -------------------
    Op = max(128, ((O + 127) // 128) * 128)
    if Op != O:
        w_stack = jnp.pad(w_stack, ((0, 0), (0, 0), (0, Op - O)))
        b_stack = jnp.pad(b_stack, ((0, 0), (0, 0), (0, Op - O)))

    vmem_limit = _vmem_limit_bytes()
    tm, tk, tn = _pick_tiles(B, H, Op, vmem_limit)
    kt = H // tk
    nt = Op // tn

    # --- per-row head selection (plain-JAX glue): idx[i] = c[num[i]] --------
    idx = jnp.asarray(c, jnp.int32)[jnp.asarray(num, jnp.int32)]        # [B]

    # --- group rows by head (stable sort) and pad each group to TM rows -----
    order = jnp.argsort(idx, stable=True)                               # [B]
    idx_sorted = idx[order]                                             # [B]

    group_sizes = jnp.bincount(idx, length=C).astype(jnp.int32)         # [C]
    padded_sizes = ((group_sizes + tm - 1) // tm) * tm                  # [C]

    unpadded_starts = jnp.concatenate(
        [jnp.zeros((1,), jnp.int32), jnp.cumsum(group_sizes)[:-1]])     # [C]
    padded_starts = jnp.concatenate(
        [jnp.zeros((1,), jnp.int32), jnp.cumsum(padded_sizes)[:-1]])    # [C]
    padded_ends = padded_starts + padded_sizes                          # [C]

    rank_in_group = jnp.arange(B, dtype=jnp.int32) - unpadded_starts[idx_sorted]
    dest_sorted = padded_starts[idx_sorted] + rank_in_group             # [B]
    dest = jnp.zeros((B,), jnp.int32).at[order].set(dest_sorted)        # [B]

    # Static upper bound on padded rows (each head pads < TM rows).
    m_pad = ((B + C * (tm - 1) + tm - 1) // tm) * tm
    num_blocks = m_pad // tm

    # TODO(synk): the x scatter + output gather below are host-side HBM round
    # trips (~2*B*H + 2*B*O extra bytes); a per-block row-index table + manual
    # DMA gather inside the kernel would remove them.
    x_padded = jnp.zeros((m_pad, H), jnp.bfloat16).at[dest_sorted].set(
        x[order].astype(jnp.bfloat16))

    # Head index of every TM-row block.  Pure-padding tail blocks map to head
    # 0; their results are never gathered, so this is harmless.
    block_starts = jnp.arange(num_blocks, dtype=jnp.int32) * tm         # [nb]
    in_group = ((block_starts[:, None] >= padded_starts[None, :])
                & (block_starts[:, None] < padded_ends[None, :]))       # [nb,C]
    block_group = jnp.argmax(in_group, axis=1).astype(jnp.int32)        # [nb]

    w_bf16 = w_stack.astype(jnp.bfloat16)   # MXU-native weight stream
    b_f32 = b_stack.astype(jnp.float32)     # tiny, keep full precision

    grid_spec = pltpu.PrefetchScalarGridSpec(
        num_scalar_prefetch=1,
        # n outermost, row-block middle, K innermost: with kt == 1 the weight
        # block index is constant across consecutive same-head row blocks, so
        # Pallas skips the redundant weight DMA (traffic ~C*H*O).
        grid=(nt, num_blocks, kt),
        in_specs=[
            pl.BlockSpec((tm, tk), lambda n, i, k, bg: (i, k)),
            pl.BlockSpec((1, tk, tn), lambda n, i, k, bg: (bg[i], k, n)),
            pl.BlockSpec((1, 1, tn), lambda n, i, k, bg: (bg[i], 0, n)),
        ],
        out_specs=pl.BlockSpec((tm, tn), lambda n, i, k, bg: (i, n)),
    )

    wbytes = 2  # bf16
    cost = pl.CostEstimate(
        flops=2 * m_pad * H * Op,
        transcendentals=m_pad * Op,
        bytes_accessed=(nt * m_pad * H * wbytes
                        + (C if kt == 1 else num_blocks) * H * Op * wbytes
                        + m_pad * Op * 4),
    )

    out_padded = pl.pallas_call(
        _grouped_head_kernel,
        out_shape=jax.ShapeDtypeStruct((m_pad, Op), jnp.float32),
        grid_spec=grid_spec,
        compiler_params=pltpu.CompilerParams(
            dimension_semantics=("parallel", "parallel", "arbitrary"),
            vmem_limit_bytes=vmem_limit,
        ),
        cost_estimate=cost,
    )(block_group, x_padded, w_bf16, b_f32)

    # Un-pad / un-permute: original row i lives at padded row dest[i].
    return out_padded[dest][:, :O]


def reference_forward(x, w_stack, b_stack, num, c):
    idx = jnp.asarray(c, jnp.int32)[jnp.asarray(num, jnp.int32)]
    w = w_stack[idx]                      # [B, H, O]
    b = b_stack[idx][:, 0, :]             # [B, O]
    z = jnp.einsum("bh,bho->bo", x, w) + b
    return jax.nn.sigmoid(z)


if __name__ == "__main__":
    key = jax.random.PRNGKey(0)
    B, H, O, C = 8, 32, 16, 4   # batch, hidden2, output, num_classes

    k1, k2, k3, k4, k5 = jax.random.split(key, 5)
    x = jax.random.normal(k1, (B, H), dtype=jnp.float32)
    # Synthetic parameters (PyTorch Linear shapes: [O, H], [O]), stacked across
    # heads and pre-transposed to the x @ W kernel layout.
    w_torch = jax.random.normal(k2, (C, O, H), dtype=jnp.float32) * 0.1
    b_torch = jax.random.normal(k3, (C, O), dtype=jnp.float32) * 0.1
    w_stack = jnp.transpose(w_torch, (0, 2, 1))       # [C, H, O]
    b_stack = b_torch[:, None, :]                      # [C, 1, O]

    c = jax.random.randint(k4, (6,), 0, C, dtype=jnp.int32)   # routing table
    num = jax.random.randint(k5, (B,), 0, c.shape[0], dtype=jnp.int32)

    out = task_forward(x, w_stack, b_stack, num, c)
    out = jax.block_until_ready(out)

    ref = reference_forward(x, w_stack, b_stack, num, c)
    assert out.shape == (B, O)
    # bf16 matmul inputs + approx reciprocal -> relaxed tolerance vs f32 ref.
    assert jnp.allclose(out, ref, atol=1e-2, rtol=1e-2), "mismatch vs reference"

    print("KERNEL_OK")
</pallas_src>

<mosaic_0001>
module attributes {stable_mosaic.version = 11 : i64} {
  func.func @_grouped_head_kernel(%arg0: i32, %arg1: i32, %arg2: i32, %arg3: memref<5xi32, #tpu.memory_space<smem>>, %arg4: memref<8x32xbf16, #tpu.memory_space<vmem>>, %arg5: memref<1x32x128xbf16, #tpu.memory_space<vmem>>, %arg6: memref<1x1x128xf32, #tpu.memory_space<vmem>>, %arg7: memref<8x128xf32, #tpu.memory_space<vmem>>) attributes {dimension_semantics = [#tpu.dimension_semantics<parallel>, #tpu.dimension_semantics<parallel>, #tpu.dimension_semantics<arbitrary>], iteration_bounds = array<i64: 1, 5, 1>, scalar_prefetch = 1 : i64, scratch_operands = 0 : i64, tpu.core_type = #tpu.core_type<tc>, window_params = [{transform_indices = @transform_0, window_bounds = array<i64: 8, 32>}, {transform_indices = @transform_1, window_bounds = array<i64: 1, 32, 128>}, {transform_indices = @transform_2, window_bounds = array<i64: 1, 1, 128>}, {transform_indices = @transform_3, window_bounds = array<i64: 8, 128>}]} {
    %c0 = arith.constant 0 : index
    %c0_0 = arith.constant 0 : index
    %0 = vector.load %arg4[%c0, %c0_0] : memref<8x32xbf16, #tpu.memory_space<vmem>>, vector<8x32xbf16>
    %c0_1 = arith.constant 0 : index
    %c0_2 = arith.constant 0 : index
    %c0_3 = arith.constant 0 : index
    %1 = vector.load %arg5[%c0_1, %c0_2, %c0_3] : memref<1x32x128xbf16, #tpu.memory_space<vmem>>, vector<1x32x128xbf16>
    %2 = vector.shape_cast %1 : vector<1x32x128xbf16> to vector<32x128xbf16>
    %cst = arith.constant dense<0.000000e+00> : vector<8x128xf32>
    %3 = tpu.matmul %0, %2, %cst {dimension_numbers = #tpu.dot_dimension_numbers<[1], [0], [0], [1], [0, 0, 1, 1], [], []>} : vector<8x32xbf16>, vector<32x128xbf16>, vector<8x128xf32> -> vector<8x128xf32>
    %c0_i32 = arith.constant 0 : i32
    %4 = arith.cmpi eq, %arg2, %c0_i32 : i32
    %5 = arith.extui %4 : i1 to i32
    %c0_i32_4 = arith.constant 0 : i32
    %6 = arith.cmpi ne, %5, %c0_i32_4 : i32
    scf.if %6 {
      %c0_9 = arith.constant 0 : index
      %c0_10 = arith.constant 0 : index
      %13 = vector.load %arg7[%c0_9, %c0_10] : memref<8x128xf32, #tpu.memory_space<vmem>>, vector<8x128xf32>
      tpu.vector_store %arg7[%c0_9, %c0_10], %3 {strides = array<i32>} : memref<8x128xf32, #tpu.memory_space<vmem>>, vector<8x128xf32>,
    } else {
    }
    %c0_i32_5 = arith.constant 0 : i32
    %7 = arith.cmpi sgt, %arg2, %c0_i32_5 : i32
    %8 = arith.extui %7 : i1 to i32
    %c0_i32_6 = arith.constant 0 : i32
    %9 = arith.cmpi ne, %8, %c0_i32_6 : i32
    scf.if %9 {
      %c0_9 = arith.constant 0 : index
      %c0_10 = arith.constant 0 : index
      %13 = vector.load %arg7[%c0_9, %c0_10] : memref<8x128xf32, #tpu.memory_space<vmem>>, vector<8x128xf32>
      %14 = arith.addf %13, %3 : vector<8x128xf32>
      %c0_11 = arith.constant 0 : index
      %c0_12 = arith.constant 0 : index
      %15 = vector.load %arg7[%c0_11, %c0_12] : memref<8x128xf32, #tpu.memory_space<vmem>>, vector<8x128xf32>
      tpu.vector_store %arg7[%c0_11, %c0_12], %14 {strides = array<i32>} : memref<8x128xf32, #tpu.memory_space<vmem>>, vector<8x128xf32>,
    } else {
    }
    %c0_i32_7 = arith.constant 0 : i32
    %10 = arith.cmpi eq, %arg2, %c0_i32_7 : i32
    %11 = arith.extui %10 : i1 to i32
    %c0_i32_8 = arith.constant 0 : i32
    %12 = arith.cmpi ne, %11, %c0_i32_8 : i32
    scf.if %12 {
      %c0_9 = arith.constant 0 : index
      %c0_10 = arith.constant 0 : index
      %13 = vector.load %arg7[%c0_9, %c0_10] : memref<8x128xf32, #tpu.memory_space<vmem>>, vector<8x128xf32>
      %c0_11 = arith.constant 0 : index
      %c0_12 = arith.constant 0 : index
      %c0_13 = arith.constant 0 : index
      %14 = vector.load %arg6[%c0_11, %c0_12, %c0_13] : memref<1x1x128xf32, #tpu.memory_space<vmem>>, vector<1x1x128xf32>
      %15 = vector.shape_cast %14 : vector<1x1x128xf32> to vector<1x128xf32>
      %16 = vector.broadcast %15 : vector<1x128xf32> to vector<8x128xf32>
      %17 = arith.addf %13, %16 : vector<8x128xf32>
      %cst_14 = arith.constant 0.000000e+00 : f32
      %18 = vector.broadcast %cst_14 : f32 to vector<8x128xf32>
      %19 = arith.subf %18, %17 : vector<8x128xf32>
      %20 = math.exp %19 : vector<8x128xf32>
      %cst_15 = arith.constant 1.000000e+00 : f32
      %21 = vector.broadcast %cst_15 : f32 to vector<8x128xf32>
      %22 = arith.addf %21, %20 : vector<8x128xf32>
      %23 = tpu.reciprocal %22 {approx = true} : vector<8x128xf32> -> vector<8x128xf32>
      %c0_16 = arith.constant 0 : index
      %c0_17 = arith.constant 0 : index
      %24 = vector.load %arg7[%c0_16, %c0_17] : memref<8x128xf32, #tpu.memory_space<vmem>>, vector<8x128xf32>
      tpu.vector_store %arg7[%c0_16, %c0_17], %23 {strides = array<i32>} : memref<8x128xf32, #tpu.memory_space<vmem>>, vector<8x128xf32>,
    } else {
    }
    return
  }
  func.func @transform_0(%arg0: i32, %arg1: i32, %arg2: i32, %arg3: memref<5xi32, #tpu.memory_space<smem>>) -> (i32, i32) {
    %c0_i32 = arith.constant 0 : i32
    return %arg1, %arg2 : i32, i32
  }
  func.func @transform_1(%arg0: i32, %arg1: i32, %arg2: i32, %arg3: memref<5xi32, #tpu.memory_space<smem>>) -> (i32, i32, i32) {
    %0 = arith.index_cast %arg1 : i32 to index
    %1 = memref.load %arg3[%0] : memref<5xi32, #tpu.memory_space<smem>>
    %c0_i32 = arith.constant 0 : i32
    return %1, %arg2, %arg0 : i32, i32, i32
  }
  func.func @transform_2(%arg0: i32, %arg1: i32, %arg2: i32, %arg3: memref<5xi32, #tpu.memory_space<smem>>) -> (i32, i32, i32) {
    %0 = arith.index_cast %arg1 : i32 to index
    %1 = memref.load %arg3[%0] : memref<5xi32, #tpu.memory_space<smem>>
    %c0_i32 = arith.constant 0 : i32
    %c0_i32_0 = arith.constant 0 : i32
    return %1, %c0_i32, %arg0 : i32, i32, i32
  }
  func.func @transform_3(%arg0: i32, %arg1: i32, %arg2: i32, %arg3: memref<5xi32, #tpu.memory_space<smem>>) -> (i32, i32) {
    %c0_i32 = arith.constant 0 : i32
    return %arg1, %arg0 : i32, i32
  }
}

</mosaic_0001>

<llo_original>
// kernel: tpu_custom_call.1
$region0: #{tpu_custom_call.1}
  #allocation0 [shape = 'u32[]', space=smem, size = 0x4, offset = 0x4, fixed_abs, tag = 'smem constant byte address 0x4 - core index']
  #allocation1 [shape = 'u32[144,128]{1,0:T(1,128)}', space=vmem, size = 0x12000, scoped, tag = 'internal scratch']
  #allocation2 [shape = 's32[1]{0}', space=sflag, size = 0x4, scoped, tag = 'scoped memory for tpu_custom_call.1']
  #allocation3 [shape = 'u8[512]{0}', space=smem, size = 0x200, scoped, tag = 'prefetched SMEM operand 0']
  %s0 = inlined_call_operand.vmem [shape: s32[5], index: 0, kind: input, shape index: {}]
  %s1 = inlined_call_operand.vmem [shape: bf16[40,32], index: 1, kind: input, shape index: {}]
  %s2 = inlined_call_operand.hbm [shape: bf16[4,32,128], index: 2, kind: input, shape index: {}]
  %s3 = inlined_call_operand.vmem [shape: f32[4,1,128], index: 3, kind: input, shape index: {}]
  %s4 = inlined_call_operand.hbm [shape: f32[40,128], index: 4, kind: output, shape index: {}]
  %s5 = sld [smem:[#allocation0]]
  $region61: #{tpu_custom_call.1} parent=0
    _
  %s7 = ssub.s32 1, %s5
  %s8 = scalar_select 0, %s7, %s5
  %s9 = sshll.u32 %s0, 4
  %s10 = int_to_ptr.vmem [resolvable:$true] %s9
  %12 = dma.vmem_to_smem %s10, 16, [#allocation3], [#allocation2]
  %13 = dma.done [#allocation2], 16
  %14 = sfence
  $region1: #{tpu_custom_call.1} parent=0
    #allocation4 [shape = 'u8[16384]{0}', space=vmem, size = 0x4000, scoped, tag = 'input window, operand 2']
    #allocation5 [shape = 's32[2]{0}', space=sflag, size = 0x8, scoped, tag = 'scoped memory for tpu_custom_call.1']
    #allocation6 [shape = 's32[2]{0}', space=sflag, size = 0x8, scoped, tag = 'scoped memory for tpu_custom_call.1']
    #allocation7 [shape = 'u8[8192]{0}', space=vmem, size = 0x2000, scoped, tag = 'output window, operand 0']
    %15 = vsyncpa [#allocation5], 0
    %s16 = scalar_lea.sflag [#allocation5], 1
    %17 = vsyncpa %s16, 0
    %18 = vsyncpa [#allocation6], 0
    %s19 = scalar_lea.sflag [#allocation6], 1
    %20 = vsyncpa %s19, 0
    loop: start=0, step=1, limit=7
    $region2: #{tpu_custom_call.1} parent=1 // loop_pre_header
      _
    $region3: #{tpu_custom_call.1} parent=1 // loop_header
      %s22 = sphi 0, %s26
      %p23 = scmp.ge.s32.totalorder %s22, 7
      %s29 = sphi 0, %s48
      %s30 = sphi 0, %s44
      %s31 = sphi 0, %s40
      %s32 = sphi 0, %s29
      %s33 = sphi 0, %s30
      %s34 = sphi 0, %s31
      %s35 = sphi 0, %s32
      %s36 = sphi 0, %s33
      %s37 = sphi 0, %s34
      %s53 = sphi 0, %s55
      %s56 = sphi 0, %s53
      %s57 = sphi 0, %s56
      %s73 = sphi 0, %s57
      %s85 = sphi 0, %s87
      %s88 = sphi 0, %s85
      %s89 = sphi 0, %s88
      %s105 = sphi 0, %s89
      %s115 = sphi 0, %s117
      %s118 = sphi 0, %s115
      %s119 = sphi 0, %s118
      %s135 = sphi 0, %s119
      %s143 = sphi 0, %s145
      %s146 = sphi 0, %s143
      %s147 = sphi 0, %s146
      %s163 = sphi 0, %s147
    $region4: #{tpu_custom_call.1} parent=1 // loop_header_branch
      %25 = sbr.rel (%p23) target = $region8
    $region5: #{tpu_custom_call.1} parent=1 // loop_body
      %s27 = ssub.s32 %s22, 1
      %s28 = ssub.s32 %s22, 2
      %s38 = sadd.s32 1, %s31
      %p39 = scmp.ge.s32.totalorder %s38, 1
      %s40 = scalar_select %p39, 0, %s38
      %s41 = sadd.s32 1, %s30
      %s42 = scalar_select %p39, %s41, %s30
      %p43 = scmp.ge.s32.totalorder %s42, 5
      %s44 = scalar_select %p43, 0, %s42
      %s45 = sadd.s32 1, %s29
      %s46 = scalar_select %p43, %s45, %s29
      %p47 = scmp.ge.s32.totalorder %s46, 1
      %s48 = scalar_select %p47, 0, %s46
      %s49 = ssub.s32 %s30, %s44
      %s50 = ssub.s32 %s31, %s40
      %s51 = sor.u32 %s49, %s50
      %p52 = scmp.eq.s32.totalorder %s51, 0
      %s54 = sadd.s32 %s53, 1
      %s55 = scalar_select %p52, %s53, %s54
      %p58 = pneg %p52
      %p59 = scmp.eq.s32.totalorder %s22, 4
      %p60 = por %p58, %p59
      %p61 = scmp.ne.s32.totalorder %s53, %s56
      %p62 = scmp.eq.s32.totalorder %s22, 0
      %p63 = por %p61, %p62
      %p64 = scmp.ne.s32.totalorder %s53, %s56
      %p65 = scmp.eq.s32.totalorder %s27, 4
      %p66 = por %p64, %p65
      %p67 = scmp.ne.s32.totalorder %s56, %s57
      %p68 = scmp.eq.s32.totalorder %s27, 0
      %p69 = por %p67, %p68
      %p70 = scmp.ne.s32.totalorder %s56, %s57
      %p71 = scmp.eq.s32.totalorder %s28, 4
      %p72 = por %p70, %p71
      %p74 = scmp.ne.s32.totalorder %s57, %s73
      %p75 = scmp.eq.s32.totalorder %s28, 0
      %p76 = por %p74, %p75
      %s77 = sld [smem:[#allocation3 + %s30]]
      %s78 = sld [smem:[#allocation3 + %s44]]
      %s79 = ssub.s32 %s77, %s78
      %s80 = ssub.s32 %s31, %s40
      %s81 = sor.u32 %s79, %s80
      %s82 = ssub.s32 %s29, %s48
      %s83 = sor.u32 %s81, %s82
      %p84 = scmp.eq.s32.totalorder %s83, 0
      %s86 = sadd.s32 %s85, 1
      %s87 = scalar_select %p84, %s85, %s86
      %p90 = pneg %p84
      %p91 = scmp.eq.s32.totalorder %s22, 4
      %p92 = por %p90, %p91
      %p93 = scmp.ne.s32.totalorder %s85, %s88
      %p94 = scmp.eq.s32.totalorder %s22, 0
      %p95 = por %p93, %p94
      %p96 = scmp.ne.s32.totalorder %s85, %s88
      %p97 = scmp.eq.s32.totalorder %s27, 4
      %p98 = por %p96, %p97
      %p99 = scmp.ne.s32.totalorder %s88, %s89
      %p100 = scmp.eq.s32.totalorder %s27, 0
      %p101 = por %p99, %p100
      %p102 = scmp.ne.s32.totalorder %s88, %s89
      %p103 = scmp.eq.s32.totalorder %s28, 4
      %p104 = por %p102, %p103
      %p106 = scmp.ne.s32.totalorder %s89, %s105
      %p107 = scmp.eq.s32.totalorder %s28, 0
      %p108 = por %p106, %p107
      %s109 = sld [smem:[#allocation3 + %s30]]
      %s110 = sld [smem:[#allocation3 + %s44]]
      %s111 = ssub.s32 %s109, %s110
      %s112 = ssub.s32 %s29, %s48
      %s113 = sor.u32 %s111, %s112
      %p114 = scmp.eq.s32.totalorder %s113, 0
      %s116 = sadd.s32 %s115, 1
      %s117 = scalar_select %p114, %s115, %s116
      %p120 = pneg %p114
      %p121 = scmp.eq.s32.totalorder %s22, 4
      %p122 = por %p120, %p121
      %p123 = scmp.ne.s32.totalorder %s115, %s118
      %p124 = scmp.eq.s32.totalorder %s22, 0
      %p125 = por %p123, %p124
      %p126 = scmp.ne.s32.totalorder %s115, %s118
      %p127 = scmp.eq.s32.totalorder %s27, 4
      %p128 = por %p126, %p127
      %p129 = scmp.ne.s32.totalorder %s118, %s119
      %p130 = scmp.eq.s32.totalorder %s27, 0
      %p131 = por %p129, %p130
      %p132 = scmp.ne.s32.totalorder %s118, %s119
      %p133 = scmp.eq.s32.totalorder %s28, 4
      %p134 = por %p132, %p133
      %p136 = scmp.ne.s32.totalorder %s119, %s135
      %p137 = scmp.eq.s32.totalorder %s28, 0
      %p138 = por %p136, %p137
      %s139 = ssub.s32 %s30, %s44
      %s140 = ssub.s32 %s29, %s48
      %s141 = sor.u32 %s139, %s140
      %p142 = scmp.eq.s32.totalorder %s141, 0
      %s144 = sadd.s32 %s143, 1
      %s145 = scalar_select %p142, %s143, %s144
      %p148 = pneg %p142
      %p149 = scmp.eq.s32.totalorder %s22, 4
      %p150 = por %p148, %p149
      %p151 = scmp.ne.s32.totalorder %s143, %s146
      %p152 = scmp.eq.s32.totalorder %s22, 0
      %p153 = por %p151, %p152
      %p154 = scmp.ne.s32.totalorder %s143, %s146
      %p155 = scmp.eq.s32.totalorder %s27, 4
      %p156 = por %p154, %p155
      %p157 = scmp.ne.s32.totalorder %s146, %s147
      %p158 = scmp.eq.s32.totalorder %s27, 0
      %p159 = por %p157, %p158
      %p160 = scmp.ne.s32.totalorder %s146, %s147
      %p161 = scmp.eq.s32.totalorder %s28, 4
      %p162 = por %p160, %p161
      %p164 = scmp.ne.s32.totalorder %s147, %s163
      %p165 = scmp.eq.s32.totalorder %s28, 0
      %p166 = por %p164, %p165
      %p167 = scmp.le.s32.totalorder 1, %s22
      %p168 = scmp.lt.s32.totalorder %s22, 6
      %p169 = pnand %p167, %p168
      %p170 = pneg %p169
      // Predicated region
      $region9: #{tpu_custom_call.1} parent=5 // pred_check
        _
      $region10: #{tpu_custom_call.1} parent=5 // pred_check_branch
        %172 = sbr.rel (%p169) target = $region12
      $region11: #{tpu_custom_call.1} parent=5 // pred_region
        %s173 = ssub.s32 %s22, 1
      $region12: #{tpu_custom_call.1} parent=5 // pred_fallthru
        _
      %p174 = scmp.lt.s32.totalorder %s22, 5
      // Predicated region
      $region13: #{tpu_custom_call.1} parent=5 // pred_check
        %p175 = pneg %p174
      $region14: #{tpu_custom_call.1} parent=5 // pred_check_branch
        %177 = sbr.rel (%p175) target = $region16
      $region15: #{tpu_custom_call.1} parent=5 // pred_region
        // Predicated region
        $region17: #{tpu_custom_call.1} parent=15 // pred_check
          %p178 = pneg %p63
        $region18: #{tpu_custom_call.1} parent=15 // pred_check_branch
          %180 = sbr.rel (%p178) target = $region20
        $region19: #{tpu_custom_call.1} parent=15 // pred_region
          %p181 = scmp.lt.s32.totalorder %s30, 4
          %s182 = scalar_select %p181, %s30, 4
          %p183 = scmp.lt.s32.totalorder %s31, 0
          %s184 = scalar_select %p183, %s31, 0
          %s185 = sadd.s32 %s184, %s182
          %s186 = smul.addr %s185, 4
          %s187 = scalar_lea.vmem %s1, %s186
        $region20: #{tpu_custom_call.1} parent=15 // pred_fallthru
          _
        // Predicated region
        $region21: #{tpu_custom_call.1} parent=15 // pred_check
          %p188 = pneg %p95
        $region22: #{tpu_custom_call.1} parent=15 // pred_check_branch
          %190 = sbr.rel (%p188) target = $region24
        $region23: #{tpu_custom_call.1} parent=15 // pred_region
          %s191 = sand.u32 %s85, 1
          %s192 = scalar_lea.sflag [#allocation5], %s191
          %s193 = sand.u32 %s85, 1
          %s194 = smul.addr %s193, 16
          %s195 = scalar_lea.vmem [#allocation4], %s194
          %s196 = sld [smem:[#allocation3 + %s30]]
          %s197 = smul.u32 4, %s31
          %s199 = ssub.s32 256, 256
          %200 = vsyncadd %s192, %s199
          %s201 = sadd.s32 %s29, %s197
          %s202 = smul.addr %s196, 4
          %s203 = sadd.s32 %s201, %s202
          %s204 = smul.addr %s203, 64
          %s205 = scalar_lea.hbm %s2, %s204
          %s206 = sshll.u32 %s195, 4
          %s207 = int_to_ptr.vmem [resolvable:$true] %s206
          %212 = dma.hbm_to_vmem [thread:$0]  %s205, 256, %s207, %s192, 64, 64, 4
        $region24: #{tpu_custom_call.1} parent=15 // pred_fallthru
          _
        // Predicated region
        $region25: #{tpu_custom_call.1} parent=15 // pred_check
          %p213 = pneg %p125
        $region26: #{tpu_custom_call.1} parent=15 // pred_check_branch
          %215 = sbr.rel (%p213) target = $region28
        $region27: #{tpu_custom_call.1} parent=15 // pred_region
          %s216 = sld [smem:[#allocation3 + %s30]]
          %p217 = scmp.lt.s32.totalorder %s216, 3
          %s218 = scalar_select %p217, %s216, 3
          %p219 = scmp.lt.s32.totalorder %s29, 0
          %s220 = scalar_select %p219, %s29, 0
          %s221 = sadd.s32 %s220, %s218
          %s222 = scalar_lea.vmem %s3, %s221
          %s223 = sld [smem:[#allocation3 + %s30]]
        $region28: #{tpu_custom_call.1} parent=15 // pred_fallthru
          _
      $region16: #{tpu_custom_call.1} parent=5 // pred_fallthru
        _
      %p224 = scmp.le.s32.totalorder 1, %s22
      %p225 = scmp.lt.s32.totalorder %s22, 6
      %p226 = pnand %p224, %p225
      %p227 = pneg %p226
      // Predicated region
      $region29: #{tpu_custom_call.1} parent=5 // pred_check
        _
      $region30: #{tpu_custom_call.1} parent=5 // pred_check_branch
        %229 = sbr.rel (%p226) target = $region32
      $region31: #{tpu_custom_call.1} parent=5 // pred_region
        %s230 = ssub.s32 %s22, 1
        %s231 = sand.u32 %s88, 1
        %s232 = scalar_lea.sflag [#allocation5], %s231
        %s233 = sand.u32 %s88, 1
        %s234 = smul.addr %s233, 16
        %s235 = scalar_lea.vmem [#allocation4], %s234
        // Predicated region
        $region33: #{tpu_custom_call.1} parent=31 // pred_check
          %p236 = pneg %p101
        $region34: #{tpu_custom_call.1} parent=31 // pred_check_branch
          %238 = sbr.rel (%p236) target = $region36
        $region35: #{tpu_custom_call.1} parent=31 // pred_region
          %239 = dma.done %s232, 256
        $region36: #{tpu_custom_call.1} parent=31 // pred_fallthru
          _
        %p240 = scmp.lt.s32.totalorder %s33, 4
        %s241 = scalar_select %p240, %s33, 4
        %p242 = scmp.lt.s32.totalorder %s34, 0
        %s243 = scalar_select %p242, %s34, 0
        %s244 = sadd.s32 %s243, %s241
        %s245 = smul.addr %s244, 4
        %s246 = scalar_lea.vmem %s1, %s245
        %p247 = pneg %p69
        %p248 = pneg %p66
        %s249 = sand.u32 %s88, 1
        %s250 = scalar_lea.sflag [#allocation5], %s249
        %s251 = sand.u32 %s88, 1
        %s252 = smul.addr %s251, 16
        %s253 = scalar_lea.vmem [#allocation4], %s252
        %p254 = pneg %p101
        %p255 = pneg %p98
        %s256 = sld [smem:[#allocation3 + %s33]]
        %p257 = scmp.lt.s32.totalorder %s256, 3
        %s258 = scalar_select %p257, %s256, 3
        %p259 = scmp.lt.s32.totalorder %s32, 0
        %s260 = scalar_select %p259, %s32, 0
        %s261 = sadd.s32 %s260, %s258
        %s262 = scalar_lea.vmem %s3, %s261
        %p263 = pneg %p131
        %p264 = pneg %p128
        %p265 = pneg %p159
        %p266 = pneg %p156
        %s267 = sand.u32 %s146, 1
        %s268 = scalar_lea.sflag [#allocation6], %s267
        %s269 = sand.u32 %s146, 1
        %s270 = smul.addr %s269, 8
        %s271 = scalar_lea.vmem [#allocation7], %s270
        %p272 = scmp.lt.s32.totalorder %s33, 4
        %s273 = scalar_select %p272, %s33, 4
        %p274 = scmp.lt.s32.totalorder %s34, 0
        %s275 = scalar_select %p274, %s34, 0
        %s276 = sadd.s32 %s275, %s273
        %s277 = smul.addr %s276, 4
        %s278 = scalar_lea.vmem %s1, %s277
        %s279 = sld [smem:[#allocation3 + %s33]]
        %s280 = smul.u32 4, %s34
        %s281 = sld [smem:[#allocation3 + %s33]]
        %p282 = scmp.lt.s32.totalorder %s281, 3
        %s283 = scalar_select %p282, %s281, 3
        %p284 = scmp.lt.s32.totalorder %s32, 0
        %s285 = scalar_select %p284, %s32, 0
        %s286 = sadd.s32 %s285, %s283
        %s287 = scalar_lea.vmem %s3, %s286
        %s288 = sld [smem:[#allocation3 + %s33]]
        %v290 = vld [vmem:[%s278] sm:$0xf]
        %v291 = vld [vmem:[%s235] sm:$0xf]
        %v292 = vld [vmem:[%s235 + $0x4] sm:$0xf]
        %v293 = vld [vmem:[%s235 + $0x8] sm:$0xf]
        %v294 = vld [vmem:[%s235 + $0xc] sm:$0xf]
        %v299 = vunpack.c.l.b16 %v291
        %v300 = vunpack.c.l.b16 %v292
        %v301 = vunpack.c.l.b16 %v293
        %v302 = vunpack.c.l.b16 %v294
        %v303 = vpack.c.b16 %v300, %v299
        %v304 = vpack.c.b16 %v302, %v301
        %vm307 = vcmask 261120
        %v309 = vsel %vm307, %v290, 0
        %311 = vmatprep.subr.bf16.mxu0 0
        %312 = vmatpush1.bf16.msra.mxu0 %v303
        %313 = vmatprep.subr.bf16.mxu0 0
        %314 = vmatpush1.bf16.msra.mxu0 %v304
        %315 = vmatprep.subr.bf16.mxu0 0
        %316 = vmatpush1.bf16.msra.mxu0 0
        %317 = vmatprep.subr.bf16.mxu0 0
        %318 = vmatpush1.bf16.msra.mxu0 0
        %319 = vmatprep.subr.bf16.mxu0 0
        %320 = vmatpush1.bf16.msra.mxu0 0
        %321 = vmatprep.subr.bf16.mxu0 0
        %322 = vmatpush1.bf16.msra.mxu0 0
        %323 = vmatprep.subr.bf16.mxu0 0
        %324 = vmatpush1.bf16.msra.mxu0 0
        %325 = vmatprep.subr.bf16.mxu0 0
        %326 = vmatpush1.bf16.msra.mxu0 0
        %327 = vmatprep.subr.bf16.mxu0 0
        %328 = vmatpush1.bf16.msra.mxu0 0
        %329 = vmatprep.subr.bf16.mxu0 0
        %330 = vmatpush1.bf16.msra.mxu0 0
        %331 = vmatprep.subr.bf16.mxu0 0
        %332 = vmatpush1.bf16.msra.mxu0 0
        %333 = vmatprep.subr.bf16.mxu0 0
        %334 = vmatpush1.bf16.msra.mxu0 0
        %335 = vmatprep.subr.bf16.mxu0 0
        %336 = vmatpush1.bf16.msra.mxu0 0
        %337 = vmatprep.subr.bf16.mxu0 0
        %338 = vmatpush1.bf16.msra.mxu0 0
        %339 = vmatprep.subr.bf16.mxu0 0
        %340 = vmatpush1.bf16.msra.mxu0 0
        %341 = vmatprep.subr.bf16.mxu0 0
        %342 = vmatpush1.bf16.msra.mxu0 0
        %343 = vmatprep.mubr.bf16.mxu0 0
        %344 = vmatmul.mubr.bf16.gmra.mrb[0].mxu0 %v309
        %v345 = vpop.f32.mrb[0].mxu0
        %v346 = vadd.f32 0.0, %v345
        %v347 = vpop.f32.mrb[0].mxu0
        %v348 = vpop.f32.mrb[0].mxu0
        %v349 = vpop.f32.mrb[0].mxu0
        %350 = vdwg.mxu0
        %p351 = scmp.eq.s32.totalorder %s34, 0
        // Predicated region
        $region37: #{tpu_custom_call.1} parent=31 // pred_check
          %p352 = pneg %p351
        $region38: #{tpu_custom_call.1} parent=31 // pred_check_branch
          %354 = sbr.rel (%p352) target = $region40
        $region39: #{tpu_custom_call.1} parent=31 // pred_region
          %355 = vst [vmem:[%s271] sm:$0xff] %v346
        $region40: #{tpu_custom_call.1} parent=31 // pred_fallthru
          _
        %p356 = scmp.gt.s32.totalorder %s34, 0
        // Predicated region
        $region41: #{tpu_custom_call.1} parent=31 // pred_check
          %p357 = pneg %p356
        $region42: #{tpu_custom_call.1} parent=31 // pred_check_branch
          %359 = sbr.rel (%p357) target = $region44
        $region43: #{tpu_custom_call.1} parent=31 // pred_region
          %v360 = vld [vmem:[%s271] sm:$0xff]
          %v361 = vadd.f32 %v360, %v346
          %362 = vst [vmem:[%s271] sm:$0xff] %v361
        $region44: #{tpu_custom_call.1} parent=31 // pred_fallthru
          _
        // Predicated region
        $region45: #{tpu_custom_call.1} parent=31 // pred_check
          %p363 = pneg %p351
        $region46: #{tpu_custom_call.1} parent=31 // pred_check_branch
          %365 = sbr.rel (%p363) target = $region48
        $region47: #{tpu_custom_call.1} parent=31 // pred_region
          %v366 = vld [vmem:[%s271] sm:$0xff]
          %v367 = vld [vmem:[%s287] sm:$0x1]
          %v369 = vlaneseq
          %v370 = vshrl.u32 %v369, 7
          %v371 = vsub.s32 0, %v370
          %v372 = vrot.slane %v367, %v371
          %v374 = vadd.f32 %v366, %v372
          %v375 = vsub.f32 0.0, %v374
          %v376 = vmul.f32 %v375, 1.442695
          %v377 = vpow.pop %v376
          %v378 = vadd.f32 %v377, 1.0
          %v379 = vrcp.pop %v378
          %380 = vst [vmem:[%s271] sm:$0xff] %v379
        $region48: #{tpu_custom_call.1} parent=31 // pred_fallthru
          _
        %s381 = sand.u32 %s146, 1
        %s382 = scalar_lea.sflag [#allocation6], %s381
        %s383 = sand.u32 %s146, 1
        %s384 = smul.addr %s383, 8
        %s385 = scalar_lea.vmem [#allocation7], %s384
        // Predicated region
        $region49: #{tpu_custom_call.1} parent=31 // pred_check
          %p386 = pneg %p156
        $region50: #{tpu_custom_call.1} parent=31 // pred_check_branch
          %388 = sbr.rel (%p386) target = $region52
        $region51: #{tpu_custom_call.1} parent=31 // pred_region
          %s390 = ssub.s32 128, 128
          %391 = vsyncadd %s382, %s390
          %s392 = sadd.s32 %s32, %s33
          %s393 = smul.addr %s392, 128
          %s394 = scalar_lea.hbm %s4, %s393
          %s396 = sshll.u32 %s385, 4
          %s397 = int_to_ptr.vmem [resolvable:$true] %s396
          %399 = dma.vmem_to_hbm [thread:$0]  %s397, 128, %s394, %s382
        $region52: #{tpu_custom_call.1} parent=31 // pred_fallthru
          _
      $region32: #{tpu_custom_call.1} parent=5 // pred_fallthru
        _
      %p400 = scmp.le.s32.totalorder 2, %s22
      // Predicated region
      $region53: #{tpu_custom_call.1} parent=5 // pred_check
        %p401 = pneg %p400
      $region54: #{tpu_custom_call.1} parent=5 // pred_check_branch
        %403 = sbr.rel (%p401) target = $region56
      $region55: #{tpu_custom_call.1} parent=5 // pred_region
        %s404 = ssub.s32 %s22, 2
        // Predicated region
        $region57: #{tpu_custom_call.1} parent=55 // pred_check
          %p405 = pneg %p162
        $region58: #{tpu_custom_call.1} parent=55 // pred_check_branch
          %407 = sbr.rel (%p405) target = $region60
        $region59: #{tpu_custom_call.1} parent=55 // pred_region
          %s408 = sand.u32 %s147, 1
          %s409 = scalar_lea.sflag [#allocation6], %s408
          %s410 = sand.u32 %s147, 1
          %s411 = smul.addr %s410, 8
          %s412 = scalar_lea.vmem [#allocation7], %s411
          %413 = dma.done %s409, 128
        $region60: #{tpu_custom_call.1} parent=55 // pred_fallthru
          _
      $region56: #{tpu_custom_call.1} parent=5 // pred_fallthru
        _
    $region6: #{tpu_custom_call.1} parent=1 // loop_footer
      %s26 = sadd.s32 1, %s22
    $region7: #{tpu_custom_call.1} parent=1 // loop_footer_branch
      %21 = sbr.rel target = $region3
    $region8: #{tpu_custom_call.1} parent=1 // loop_exit
      _
    %414 = vsyncpa [#allocation5], 1
    %s415 = scalar_lea.sflag [#allocation5], 1
    %416 = vsyncpa %s415, 1
    %417 = vsyncpa [#allocation6], 1
    %s418 = scalar_lea.sflag [#allocation6], 1
    %419 = vsyncpa %s418, 1

</llo_original>
